<compile_context>
chip_gen: v5e
topology: v5e:2x2
jax: 0.10.0
libtpu: 0.0.40
codegen_flags: <defaults>
</compile_context>

<pallas_src>
import functools

import jax
import jax.numpy as jnp
import numpy as np
from jax.experimental import pallas as pl
from jax.experimental.pallas import tpu as pltpu


# ----------------------------- Pallas kernel ------------------------------ #
def _rope_qk_kernel(q_ref, k_ref, c_ref, s_ref, oq_ref, ok_ref, *, rh, seg):
    """Rotate q and k with precombined tables.

    Layouts:
      headed: q/k blocks (tS, H, D), tables (tS, D),   seg == D == lane width.
      flat  : q/k blocks (tS, H*D),  tables (tS, H*D), seg == D (per-head segment).
    Tables (per head segment of width D): C = [cos, cos, 1...], S = [-sin, sin, 0...].
    """
    headed = len(q_ref.shape) == 3
    c = c_ref[...].astype(jnp.float32)
    s = s_ref[...].astype(jnp.float32)
    if headed:
        c = c[:, None, :]          # (tS, 1, D) -> broadcast over heads
        s = s[:, None, :]

    W = q_ref.shape[-1]            # lane width (D or H*D)
    lane = jax.lax.broadcasted_iota(jnp.int32, (1, W), 1)
    first_half = (lane % seg) < rh                     # (1, W)

    def _rotate(x_ref, o_ref):
        x = x_ref[...].astype(jnp.float32)
        x2d = x.reshape(-1, W) if headed else x
        # jnp.roll semantics: roll(x, t)[p] == x[p - t].
        fwd = pltpu.roll(x2d, shift=W - rh, axis=1)    # lane p <- x[p + rh]
        bwd = pltpu.roll(x2d, shift=rh, axis=1)        # lane p <- x[p - rh]
        rot = jnp.where(first_half, fwd, bwd)
        if headed:
            rot = rot.reshape(x.shape)
        o_ref[...] = (x * c + rot * s).astype(o_ref.dtype)

    _rotate(q_ref, oq_ref)
    _rotate(k_ref, ok_ref)


# ------------------------------ Host helpers ------------------------------ #
def _vmem_capacity_bytes():
    try:
        info = pltpu.get_tpu_info()
        cap = int(getattr(info, "vmem_capacity_bytes", 0))
        if cap > 0:
            return cap
    except Exception:
        pass
    return 128 << 20


def _choose_seq_tile(S, bytes_per_row, target_bytes, min_tiles=1):
    """Sequence-tile length: multiple of 8, ~target_bytes/step, >= min_tiles tiles."""
    if S <= 8:
        return S
    rows = target_bytes // max(int(bytes_per_row), 1)
    rows = max(8, min(int(rows), S))
    rows = max(8, (rows // 8) * 8)
    # v7x has 2 TensorCores: make sure the parallel grid has at least `min_tiles` steps.
    while min_tiles > 1 and rows > 8 and (S + rows - 1) // rows < min_tiles:
        rows = max(8, ((rows // 2) // 8) * 8)
    return rows


def apply_rotary_qk_pallas(q, k, cos_tab, sin_tab, *, rotary_half, head_dim, flat):
    """Apply non-interleaved rotary to q and k: (B, S, H, D), fused in one pallas_call."""
    B, S, H, D = q.shape
    Bk, Sk, Hk, Dk = k.shape
    assert (Bk, Sk, Dk) == (B, S, D) and D == head_dim

    table_w = cos_tab.shape[-1]
    assert cos_tab.shape == (S, table_w) and sin_tab.shape == (S, table_w)

    if flat:
        assert Hk == H and table_w == H * D
        q_in = q.reshape(B, S, H * D)          # free: contiguous minor-dim collapse
        k_in = k.reshape(Bk, S, Hk * D)
    else:
        assert table_w == D
        q_in, k_in = q, k

    itemsize = q.dtype.itemsize
    t_item = cos_tab.dtype.itemsize
    # q/k (read + write) + both tables, per sequence row.
    bytes_per_row = 2 * (H + Hk) * D * itemsize + 2 * table_w * t_item

    cap = _vmem_capacity_bytes()
    target_bytes = min(20 << 20, cap // 5)     # ~20 MiB on v5e/v6e, ~12.8 MiB on v7x
    min_tiles = 2 if B == 1 else 1             # keep both v7x cores busy at batch == 1
    tS = _choose_seq_tile(S, bytes_per_row, target_bytes, min_tiles)
    num_s = pl.cdiv(S, tS)
    grid = (num_s, B)                          # batch innermost -> table DMA reused per b

    step_bytes = tS * bytes_per_row
    vmem_limit = min(int(cap * 0.9), max(32 << 20, int(2.2 * step_bytes) + (4 << 20)))

    kernel = functools.partial(_rope_qk_kernel, rh=rotary_half, seg=D)

    if flat:
        def x_spec(w):
            return pl.BlockSpec((None, tS, w), lambda si, bi: (bi, si, 0))
        in_x = [x_spec(H * D), x_spec(Hk * D)]
        out_x = (x_spec(H * D), x_spec(Hk * D))
    else:
        def x_spec(nh):
            return pl.BlockSpec((None, tS, nh, D), lambda si, bi: (bi, si, 0, 0))
        in_x = [x_spec(H), x_spec(Hk)]
        out_x = (x_spec(H), x_spec(Hk))
    tab_spec = pl.BlockSpec((tS, table_w), lambda si, bi: (si, 0))

    q_out, k_out = pl.pallas_call(
        kernel,
        out_shape=(jax.ShapeDtypeStruct(q_in.shape, q.dtype),
                   jax.ShapeDtypeStruct(k_in.shape, k.dtype)),
        grid=grid,
        in_specs=in_x + [tab_spec, tab_spec],
        out_specs=out_x,
        compiler_params=pltpu.CompilerParams(
            dimension_semantics=("parallel", "parallel"),
            vmem_limit_bytes=int(vmem_limit)),
    )(q_in, k_in, cos_tab, sin_tab)

    if flat:
        q_out = q_out.reshape(B, S, H, D)
        k_out = k_out.reshape(Bk, S, Hk, D)
    return q_out, k_out


# --------------------------- Module equivalent ----------------------------- #
class FlashRotaryEmbedding:
    """JAX/Pallas port of FlashRotaryEmbedding (scale_base=None, non-interleaved path)."""

    def __init__(self, dim, base=10000.0, max_position_embeddings=2048,
                 interleaved=False, scale_base=None, scaling_factor=1.0):
        assert scale_base is None, "scale_base path asserts False in the reference forward"
        assert not interleaved  # TODO(synk): interleaved (GPT-J style) rotary not implemented.
        assert dim % 2 == 0
        self.dim = dim
        self.base = float(base)
        self.max_position_embeddings = int(max_position_embeddings)
        self.scaling_factor = scaling_factor
        # inv_freq buffer, same as torch _compute_inv_freq (float32).
        self.inv_freq = 1.0 / (self.base ** (
            jnp.arange(0, dim, 2, dtype=jnp.float32) / dim))
        self._tab_cache = {}   # (head_dim, n_rep, dtype) -> (cached_len, C, S)

    def _get_tables(self, total_len, head_dim, n_rep, dtype):
        """Grow-only cache of full-width tables C=[cos,cos,1...], S=[-sin,sin,0...]."""
        key = (int(head_dim), int(n_rep), np.dtype(dtype).name)
        hit = self._tab_cache.get(key)
        if hit is not None and hit[0] >= total_len:
            return hit[1], hit[2]
        seqlen = max(int(total_len), self.max_position_embeddings)
        t = jnp.arange(seqlen, dtype=jnp.float32) / self.scaling_factor
        freqs = jnp.outer(t, self.inv_freq)          # (seqlen, dim//2), float32
        cos = jnp.cos(freqs)
        sin = jnp.sin(freqs)
        tail = head_dim - 2 * (self.dim // 2)
        c_parts = [cos, cos]
        s_parts = [-sin, sin]
        if tail > 0:                                  # pass-through tail (partial rotary)
            c_parts.append(jnp.ones((seqlen, tail), jnp.float32))
            s_parts.append(jnp.zeros((seqlen, tail), jnp.float32))
        c = jnp.concatenate(c_parts, axis=-1)        # (seqlen, head_dim)
        s = jnp.concatenate(s_parts, axis=-1)
        if n_rep > 1:                                # flat layout: one segment per head
            c = jnp.tile(c, (1, n_rep))
            s = jnp.tile(s, (1, n_rep))
        c = c.astype(dtype)                          # stored in q.dtype (f32 math in-kernel)
        s = s.astype(dtype)
        self._tab_cache[key] = (seqlen, c, s)
        return c, s

    def __call__(self, q, k, seqlen_offset=0):
        # q, k: (batch, seqlen, nheads, headdim)
        B, S, H, D = q.shape
        Hk = k.shape[2]
        assert self.dim <= D
        rh = self.dim // 2
        # Flatten heads into the lane dim whenever headdim is not already lane-dense.
        flat = (D % 128 != 0) and (H == Hk)
        n_rep = H if flat else 1
        cos_full, sin_full = self._get_tables(S + seqlen_offset, D, n_rep, q.dtype)
        # TODO(synk): for decode, pass seqlen_offset via scalar prefetch instead of host slicing.
        cos_tab = cos_full[seqlen_offset:seqlen_offset + S]
        sin_tab = sin_full[seqlen_offset:seqlen_offset + S]
        return apply_rotary_qk_pallas(q, k, cos_tab, sin_tab,
                                      rotary_half=rh, head_dim=D, flat=flat)


# ------------------------------- Reference -------------------------------- #
def _rotary_ref(x, cos, sin):
    # cos/sin: (S, rh) float32 (non-interleaved, GPT-NeoX style)
    rh = cos.shape[-1]
    xf = x.astype(jnp.float32)
    x1, x2 = xf[..., :rh], xf[..., rh:2 * rh]
    c = cos[None, :, None, :]
    s = sin[None, :, None, :]
    o1 = x1 * c - x2 * s
    o2 = x1 * s + x2 * c
    parts = [o1, o2]
    if 2 * rh < x.shape[-1]:
        parts.append(xf[..., 2 * rh:])
    return jnp.concatenate(parts, axis=-1).astype(x.dtype)


if __name__ == "__main__":
    key = jax.random.PRNGKey(0)
    kq, kk, kq2, kk2 = jax.random.split(key, 4)

    # --- Flat layout (headdim < 128): B=2, S=8, H=4, D=32 -------------------
    B, S, H, D = 2, 8, 4, 32
    q = jax.random.normal(kq, (B, S, H, D), dtype=jnp.float32)
    k = jax.random.normal(kk, (B, S, H, D), dtype=jnp.float32)

    rope = FlashRotaryEmbedding(dim=D)
    q_out, k_out = rope(q, k, seqlen_offset=0)
    jax.block_until_ready((q_out, k_out))

    t = jnp.arange(S, dtype=jnp.float32)
    cos_r = jnp.cos(jnp.outer(t, rope.inv_freq))
    sin_r = jnp.sin(jnp.outer(t, rope.inv_freq))
    np.testing.assert_allclose(np.asarray(q_out), np.asarray(_rotary_ref(q, cos_r, sin_r)),
                               rtol=1e-5, atol=1e-5)
    np.testing.assert_allclose(np.asarray(k_out), np.asarray(_rotary_ref(k, cos_r, sin_r)),
                               rtol=1e-5, atol=1e-5)

    # --- Partial rotary (rotary_dim < headdim) on the flat layout -----------
    rope_p = FlashRotaryEmbedding(dim=16)
    qp_out, kp_out = rope_p(q, k, seqlen_offset=0)
    jax.block_until_ready((qp_out, kp_out))
    cos_p = jnp.cos(jnp.outer(t, rope_p.inv_freq))
    sin_p = jnp.sin(jnp.outer(t, rope_p.inv_freq))
    np.testing.assert_allclose(np.asarray(qp_out), np.asarray(_rotary_ref(q, cos_p, sin_p)),
                               rtol=1e-5, atol=1e-5)
    np.testing.assert_allclose(np.asarray(kp_out), np.asarray(_rotary_ref(k, cos_p, sin_p)),
                               rtol=1e-5, atol=1e-5)

    # --- seqlen_offset (decode-style, cache hit + slice) ---------------------
    off = 3
    qo_out, ko_out = rope(q, k, seqlen_offset=off)
    jax.block_until_ready((qo_out, ko_out))
    t_off = jnp.arange(off, off + S, dtype=jnp.float32)
    cos_o = jnp.cos(jnp.outer(t_off, rope.inv_freq))
    sin_o = jnp.sin(jnp.outer(t_off, rope.inv_freq))
    np.testing.assert_allclose(np.asarray(qo_out), np.asarray(_rotary_ref(q, cos_o, sin_o)),
                               rtol=1e-5, atol=1e-5)

    # --- Headed layout (headdim == 128, already lane-dense) ------------------
    Bh, Sh, Hh, Dh = 2, 8, 2, 128
    qh = jax.random.normal(kq2, (Bh, Sh, Hh, Dh), dtype=jnp.float32)
    kh = jax.random.normal(kk2, (Bh, Sh, Hh, Dh), dtype=jnp.float32)
    rope_h = FlashRotaryEmbedding(dim=Dh)
    qh_out, kh_out = rope_h(qh, kh, seqlen_offset=0)
    jax.block_until_ready((qh_out, kh_out))
    th = jnp.arange(Sh, dtype=jnp.float32)
    cos_h = jnp.cos(jnp.outer(th, rope_h.inv_freq))
    sin_h = jnp.sin(jnp.outer(th, rope_h.inv_freq))
    np.testing.assert_allclose(np.asarray(qh_out), np.asarray(_rotary_ref(qh, cos_h, sin_h)),
                               rtol=1e-5, atol=1e-5)
    np.testing.assert_allclose(np.asarray(kh_out), np.asarray(_rotary_ref(kh, cos_h, sin_h)),
                               rtol=1e-5, atol=1e-5)

    print("KERNEL_OK")
</pallas_src>

<mosaic_0001>
module attributes {stable_mosaic.version = 11 : i64} {
  func.func @_rope_qk_kernel(%arg0: i32, %arg1: i32, %arg2: memref<1x8x128xf32, #tpu.memory_space<vmem>>, %arg3: memref<1x8x128xf32, #tpu.memory_space<vmem>>, %arg4: memref<8x128xf32, #tpu.memory_space<vmem>>, %arg5: memref<8x128xf32, #tpu.memory_space<vmem>>, %arg6: memref<1x8x128xf32, #tpu.memory_space<vmem>>, %arg7: memref<1x8x128xf32, #tpu.memory_space<vmem>>) attributes {dimension_semantics = [#tpu.dimension_semantics<parallel>, #tpu.dimension_semantics<parallel>], iteration_bounds = array<i64: 1, 2>, scalar_prefetch = 0 : i64, scratch_operands = 0 : i64, tpu.core_type = #tpu.core_type<tc>, window_params = [{transform_indices = @transform_0, window_bounds = array<i64: 1, 8, 128>}, {transform_indices = @transform_1, window_bounds = array<i64: 1, 8, 128>}, {transform_indices = @transform_2, window_bounds = array<i64: 8, 128>}, {transform_indices = @transform_3, window_bounds = array<i64: 8, 128>}, {transform_indices = @transform_4, window_bounds = array<i64: 1, 8, 128>}, {transform_indices = @transform_5, window_bounds = array<i64: 1, 8, 128>}]} {
    %c0 = arith.constant 0 : index
    %c0_0 = arith.constant 0 : index
    %0 = vector.load %arg4[%c0, %c0_0] : memref<8x128xf32, #tpu.memory_space<vmem>>, vector<8x128xf32>
    %c0_1 = arith.constant 0 : index
    %c0_2 = arith.constant 0 : index
    %1 = vector.load %arg5[%c0_1, %c0_2] : memref<8x128xf32, #tpu.memory_space<vmem>>, vector<8x128xf32>
    %2 = tpu.iota {dimensions = array<i32: 1>} : vector<1x128xi32>
    %c32_i32 = arith.constant 32 : i32
    %c0_i32 = arith.constant 0 : i32
    %3 = arith.cmpi eq, %c32_i32, %c0_i32 : i32
    %c1_i32 = arith.constant 1 : i32
    %4 = arith.select %3, %c1_i32, %c32_i32 : i32
    %5 = vector.broadcast %4 : i32 to vector<1x128xi32>
    %6 = arith.remsi %2, %5 : vector<1x128xi32>
    %c0_i32_3 = arith.constant 0 : i32
    %7 = vector.broadcast %c0_i32_3 : i32 to vector<1x128xi32>
    %8 = arith.cmpi ne, %6, %7 : vector<1x128xi32>
    %c0_i32_4 = arith.constant 0 : i32
    %9 = vector.broadcast %c0_i32_4 : i32 to vector<1x128xi32>
    %10 = arith.cmpi slt, %6, %9 : vector<1x128xi32>
    %c0_i32_5 = arith.constant 0 : i32
    %11 = arith.cmpi slt, %4, %c0_i32_5 : i32
    %12 = vector.broadcast %11 : i1 to vector<1x128xi1>
    %13 = vector.broadcast %12 : vector<1x128xi1> to vector<1x128xi1>
    %14 = arith.xori %10, %13 : vector<1x128xi1>
    %15 = arith.andi %14, %8 : vector<1x128xi1>
    %16 = vector.broadcast %4 : i32 to vector<1x128xi32>
    %17 = arith.addi %6, %16 : vector<1x128xi32>
    %18 = arith.select %15, %17, %6 : vector<1x128xi1>, vector<1x128xi32>
    %c16_i32 = arith.constant 16 : i32
    %19 = vector.broadcast %c16_i32 : i32 to vector<1x128xi32>
    %20 = arith.cmpi slt, %18, %19 : vector<1x128xi32>
    %c0_6 = arith.constant 0 : index
    %c0_7 = arith.constant 0 : index
    %c0_8 = arith.constant 0 : index
    %21 = vector.load %arg2[%c0_6, %c0_7, %c0_8] : memref<1x8x128xf32, #tpu.memory_space<vmem>>, vector<1x8x128xf32>
    %22 = vector.shape_cast %21 : vector<1x8x128xf32> to vector<8x128xf32>
    %c112_i32 = arith.constant 112 : i32
    %23 = tpu.dynamic_rotate %22 by %c112_i32 dim 1 : vector<8x128xf32>, i32 -> vector<8x128xf32>
    %c16_i32_9 = arith.constant 16 : i32
    %24 = tpu.dynamic_rotate %22 by %c16_i32_9 dim 1 : vector<8x128xf32>, i32 -> vector<8x128xf32>
    %25 = vector.shape_cast %20 : vector<1x128xi1> to vector<1x128xi1>
    %26 = vector.broadcast %25 : vector<1x128xi1> to vector<8x128xi1>
    %27 = arith.select %26, %23, %24 : vector<8x128xi1>, vector<8x128xf32>
    %28 = arith.mulf %22, %0 : vector<8x128xf32>
    %29 = arith.mulf %27, %1 : vector<8x128xf32>
    %30 = arith.addf %28, %29 : vector<8x128xf32>
    %c0_10 = arith.constant 0 : index
    %c0_11 = arith.constant 0 : index
    %c0_12 = arith.constant 0 : index
    %31 = vector.load %arg6[%c0_10, %c0_11, %c0_12] : memref<1x8x128xf32, #tpu.memory_space<vmem>>, vector<1x8x128xf32>
    %32 = vector.shape_cast %31 : vector<1x8x128xf32> to vector<8x128xf32>
    %33 = vector.shape_cast %30 : vector<8x128xf32> to vector<1x8x128xf32>
    tpu.vector_store %arg6[%c0_10, %c0_11, %c0_12], %33 {strides = array<i32>} : memref<1x8x128xf32, #tpu.memory_space<vmem>>, vector<1x8x128xf32>,
    %c0_13 = arith.constant 0 : index
    %c0_14 = arith.constant 0 : index
    %c0_15 = arith.constant 0 : index
    %34 = vector.load %arg3[%c0_13, %c0_14, %c0_15] : memref<1x8x128xf32, #tpu.memory_space<vmem>>, vector<1x8x128xf32>
    %35 = vector.shape_cast %34 : vector<1x8x128xf32> to vector<8x128xf32>
    %c112_i32_16 = arith.constant 112 : i32
    %36 = tpu.dynamic_rotate %35 by %c112_i32_16 dim 1 : vector<8x128xf32>, i32 -> vector<8x128xf32>
    %c16_i32_17 = arith.constant 16 : i32
    %37 = tpu.dynamic_rotate %35 by %c16_i32_17 dim 1 : vector<8x128xf32>, i32 -> vector<8x128xf32>
    %38 = vector.shape_cast %20 : vector<1x128xi1> to vector<1x128xi1>
    %39 = vector.broadcast %38 : vector<1x128xi1> to vector<8x128xi1>
    %40 = arith.select %39, %36, %37 : vector<8x128xi1>, vector<8x128xf32>
    %41 = arith.mulf %35, %0 : vector<8x128xf32>
    %42 = arith.mulf %40, %1 : vector<8x128xf32>
    %43 = arith.addf %41, %42 : vector<8x128xf32>
    %c0_18 = arith.constant 0 : index
    %c0_19 = arith.constant 0 : index
    %c0_20 = arith.constant 0 : index
    %44 = vector.load %arg7[%c0_18, %c0_19, %c0_20] : memref<1x8x128xf32, #tpu.memory_space<vmem>>, vector<1x8x128xf32>
    %45 = vector.shape_cast %44 : vector<1x8x128xf32> to vector<8x128xf32>
    %46 = vector.shape_cast %43 : vector<8x128xf32> to vector<1x8x128xf32>
    tpu.vector_store %arg7[%c0_18, %c0_19, %c0_20], %46 {strides = array<i32>} : memref<1x8x128xf32, #tpu.memory_space<vmem>>, vector<1x8x128xf32>,
    return
  }
  func.func @transform_0(%arg0: i32, %arg1: i32) -> (i32, i32, i32) {
    %c0_i32 = arith.constant 0 : i32
    %c0_i32_0 = arith.constant 0 : i32
    return %arg1, %arg0, %c0_i32 : i32, i32, i32
  }
  func.func @transform_1(%arg0: i32, %arg1: i32) -> (i32, i32, i32) {
    %c0_i32 = arith.constant 0 : i32
    %c0_i32_0 = arith.constant 0 : i32
    return %arg1, %arg0, %c0_i32 : i32, i32, i32
  }
  func.func @transform_2(%arg0: i32, %arg1: i32) -> (i32, i32) {
    %c0_i32 = arith.constant 0 : i32
    %c0_i32_0 = arith.constant 0 : i32
    return %arg0, %c0_i32 : i32, i32
  }
  func.func @transform_3(%arg0: i32, %arg1: i32) -> (i32, i32) {
    %c0_i32 = arith.constant 0 : i32
    %c0_i32_0 = arith.constant 0 : i32
    return %arg0, %c0_i32 : i32, i32
  }
  func.func @transform_4(%arg0: i32, %arg1: i32) -> (i32, i32, i32) {
    %c0_i32 = arith.constant 0 : i32
    %c0_i32_0 = arith.constant 0 : i32
    return %arg1, %arg0, %c0_i32 : i32, i32, i32
  }
  func.func @transform_5(%arg0: i32, %arg1: i32) -> (i32, i32, i32) {
    %c0_i32 = arith.constant 0 : i32
    %c0_i32_0 = arith.constant 0 : i32
    return %arg1, %arg0, %c0_i32 : i32, i32, i32
  }
}

</mosaic_0001>

<llo_original>
// kernel: tpu_custom_call.1
$region0: #{tpu_custom_call.1}
  #allocation0 [shape = 'u32[]', space=smem, size = 0x4, offset = 0x4, fixed_abs, tag = 'smem constant byte address 0x4 - core index']
  #allocation1 [shape = 'u32[72,128]{1,0:T(1,128)}', space=vmem, size = 0x9000, scoped, tag = 'internal scratch']
  %s0 = inlined_call_operand.hbm [shape: f32[2,8,128], index: 0, kind: input, shape index: {}]
  %s1 = inlined_call_operand.hbm [shape: f32[2,8,128], index: 1, kind: input, shape index: {}]
  %s2 = inlined_call_operand.hbm [shape: f32[8,128], index: 2, kind: input, shape index: {}]
  %s3 = inlined_call_operand.hbm [shape: f32[8,128], index: 3, kind: input, shape index: {}]
  %s4 = inlined_call_operand.hbm [shape: f32[2,8,128], index: 4, kind: output, shape index: {0}]
  %s5 = inlined_call_operand.hbm [shape: f32[2,8,128], index: 5, kind: output, shape index: {1}]
  %6 = xla_tuple %s4, %s5
  %s7 = sld [smem:[#allocation0]]
  $region73: #{tpu_custom_call.1} parent=0
    _
  %s9 = ssub.s32 1, %s7
  %s10 = scalar_select 0, %s9, %s7
  $region1: #{tpu_custom_call.1} parent=0
    #allocation2 [shape = 'u8[8192]{0}', space=vmem, size = 0x2000, scoped, tag = 'input window, operand 0']
    #allocation3 [shape = 's32[2]{0}', space=sflag, size = 0x8, scoped, tag = 'scoped memory for tpu_custom_call.1']
    #allocation4 [shape = 's32[2]{0}', space=sflag, size = 0x8, scoped, tag = 'scoped memory for tpu_custom_call.1']
    #allocation5 [shape = 'u8[8192]{0}', space=vmem, size = 0x2000, scoped, tag = 'input window, operand 1']
    #allocation6 [shape = 's32[2]{0}', space=sflag, size = 0x8, scoped, tag = 'scoped memory for tpu_custom_call.1']
    #allocation7 [shape = 'u8[4096]{0}', space=vmem, size = 0x1000, scoped, tag = 'input window, operand 2, single buffered']
    #allocation8 [shape = 'u8[4096]{0}', space=vmem, size = 0x1000, scoped, tag = 'input window, operand 3, single buffered']
    #allocation9 [shape = 's32[1]{0}', space=sflag, size = 0x4, scoped, tag = 'scoped memory for tpu_custom_call.1']
    #allocation10 [shape = 'u8[8192]{0}', space=vmem, size = 0x2000, scoped, tag = 'output window, operand 0']
    #allocation11 [shape = 'u8[8192]{0}', space=vmem, size = 0x2000, scoped, tag = 'output window, operand 1']
    #allocation12 [shape = 's32[2]{0}', space=sflag, size = 0x8, scoped, tag = 'scoped memory for tpu_custom_call.1']
    %11 = vsyncpa [#allocation3], 0
    %s12 = scalar_lea.sflag [#allocation3], 1
    %13 = vsyncpa %s12, 0
    %14 = vsyncpa [#allocation6], 0
    %s15 = scalar_lea.sflag [#allocation6], 1
    %16 = vsyncpa %s15, 0
    %17 = vsyncpa [#allocation9], 0
    %18 = vsyncpa [#allocation4], 0
    %s19 = scalar_lea.sflag [#allocation4], 1
    %20 = vsyncpa %s19, 0
    %21 = vsyncpa [#allocation12], 0
    %s22 = scalar_lea.sflag [#allocation12], 1
    %23 = vsyncpa %s22, 0
    loop: start=0, step=1, limit=4
    $region2: #{tpu_custom_call.1} parent=1 // loop_pre_header
      _
    $region3: #{tpu_custom_call.1} parent=1 // loop_header
      %s25 = sphi 0, %s29
      %p26 = scmp.ge.s32.totalorder %s25, 4
      %s32 = sphi 0, %s44
      %s33 = sphi 0, %s40
      %s34 = sphi 0, %s32
      %s35 = sphi 0, %s33
      %s36 = sphi 0, %s34
      %s37 = sphi 0, %s35
      %s49 = sphi 0, %s51
      %s52 = sphi 0, %s49
      %s53 = sphi 0, %s52
      %s69 = sphi 0, %s53
      %s77 = sphi 0, %s79
      %s80 = sphi 0, %s77
      %s81 = sphi 0, %s80
      %s97 = sphi 0, %s81
      %s103 = sphi 0, %s105
      %s106 = sphi 0, %s103
      %s107 = sphi 0, %s106
      %s123 = sphi 0, %s107
      %s129 = sphi 0, %s131
      %s132 = sphi 0, %s129
      %s133 = sphi 0, %s132
      %s149 = sphi 0, %s133
      %s157 = sphi 0, %s159
      %s160 = sphi 0, %s157
      %s161 = sphi 0, %s160
      %s177 = sphi 0, %s161
      %s185 = sphi 0, %s187
      %s188 = sphi 0, %s185
      %s189 = sphi 0, %s188
      %s205 = sphi 0, %s189
    $region4: #{tpu_custom_call.1} parent=1 // loop_header_branch
      %28 = sbr.rel (%p26) target = $region8
    $region5: #{tpu_custom_call.1} parent=1 // loop_body
      %s30 = ssub.s32 %s25, 1
      %s31 = ssub.s32 %s25, 2
      %s38 = sadd.s32 1, %s33
      %p39 = scmp.ge.s32.totalorder %s38, 2
      %s40 = scalar_select %p39, 0, %s38
      %s41 = sadd.s32 1, %s32
      %s42 = scalar_select %p39, %s41, %s32
      %p43 = scmp.ge.s32.totalorder %s42, 1
      %s44 = scalar_select %p43, 0, %s42
      %s45 = ssub.s32 %s33, %s40
      %s46 = ssub.s32 %s32, %s44
      %s47 = sor.u32 %s45, %s46
      %p48 = scmp.eq.s32.totalorder %s47, 0
      %s50 = sadd.s32 %s49, 1
      %s51 = scalar_select %p48, %s49, %s50
      %p54 = pneg %p48
      %p55 = scmp.eq.s32.totalorder %s25, 1
      %p56 = por %p54, %p55
      %p57 = scmp.ne.s32.totalorder %s49, %s52
      %p58 = scmp.eq.s32.totalorder %s25, 0
      %p59 = por %p57, %p58
      %p60 = scmp.ne.s32.totalorder %s49, %s52
      %p61 = scmp.eq.s32.totalorder %s30, 1
      %p62 = por %p60, %p61
      %p63 = scmp.ne.s32.totalorder %s52, %s53
      %p64 = scmp.eq.s32.totalorder %s30, 0
      %p65 = por %p63, %p64
      %p66 = scmp.ne.s32.totalorder %s52, %s53
      %p67 = scmp.eq.s32.totalorder %s31, 1
      %p68 = por %p66, %p67
      %p70 = scmp.ne.s32.totalorder %s53, %s69
      %p71 = scmp.eq.s32.totalorder %s31, 0
      %p72 = por %p70, %p71
      %s73 = ssub.s32 %s33, %s40
      %s74 = ssub.s32 %s32, %s44
      %s75 = sor.u32 %s73, %s74
      %p76 = scmp.eq.s32.totalorder %s75, 0
      %s78 = sadd.s32 %s77, 1
      %s79 = scalar_select %p76, %s77, %s78
      %p82 = pneg %p76
      %p83 = scmp.eq.s32.totalorder %s25, 1
      %p84 = por %p82, %p83
      %p85 = scmp.ne.s32.totalorder %s77, %s80
      %p86 = scmp.eq.s32.totalorder %s25, 0
      %p87 = por %p85, %p86
      %p88 = scmp.ne.s32.totalorder %s77, %s80
      %p89 = scmp.eq.s32.totalorder %s30, 1
      %p90 = por %p88, %p89
      %p91 = scmp.ne.s32.totalorder %s80, %s81
      %p92 = scmp.eq.s32.totalorder %s30, 0
      %p93 = por %p91, %p92
      %p94 = scmp.ne.s32.totalorder %s80, %s81
      %p95 = scmp.eq.s32.totalorder %s31, 1
      %p96 = por %p94, %p95
      %p98 = scmp.ne.s32.totalorder %s81, %s97
      %p99 = scmp.eq.s32.totalorder %s31, 0
      %p100 = por %p98, %p99
      %s101 = ssub.s32 %s32, %s44
      %p102 = scmp.eq.s32.totalorder %s101, 0
      %s104 = sadd.s32 %s103, 1
      %s105 = scalar_select %p102, %s103, %s104
      %p108 = pneg %p102
      %p109 = scmp.eq.s32.totalorder %s25, 1
      %p110 = por %p108, %p109
      %p111 = scmp.ne.s32.totalorder %s103, %s106
      %p112 = scmp.eq.s32.totalorder %s25, 0
      %p113 = por %p111, %p112
      %p114 = scmp.ne.s32.totalorder %s103, %s106
      %p115 = scmp.eq.s32.totalorder %s30, 1
      %p116 = por %p114, %p115
      %p117 = scmp.ne.s32.totalorder %s106, %s107
      %p118 = scmp.eq.s32.totalorder %s30, 0
      %p119 = por %p117, %p118
      %p120 = scmp.ne.s32.totalorder %s106, %s107
      %p121 = scmp.eq.s32.totalorder %s31, 1
      %p122 = por %p120, %p121
      %p124 = scmp.ne.s32.totalorder %s107, %s123
      %p125 = scmp.eq.s32.totalorder %s31, 0
      %p126 = por %p124, %p125
      %s127 = ssub.s32 %s32, %s44
      %p128 = scmp.eq.s32.totalorder %s127, 0
      %s130 = sadd.s32 %s129, 1
      %s131 = scalar_select %p128, %s129, %s130
      %p134 = pneg %p128
      %p135 = scmp.eq.s32.totalorder %s25, 1
      %p136 = por %p134, %p135
      %p137 = scmp.ne.s32.totalorder %s129, %s132
      %p138 = scmp.eq.s32.totalorder %s25, 0
      %p139 = por %p137, %p138
      %p140 = scmp.ne.s32.totalorder %s129, %s132
      %p141 = scmp.eq.s32.totalorder %s30, 1
      %p142 = por %p140, %p141
      %p143 = scmp.ne.s32.totalorder %s132, %s133
      %p144 = scmp.eq.s32.totalorder %s30, 0
      %p145 = por %p143, %p144
      %p146 = scmp.ne.s32.totalorder %s132, %s133
      %p147 = scmp.eq.s32.totalorder %s31, 1
      %p148 = por %p146, %p147
      %p150 = scmp.ne.s32.totalorder %s133, %s149
      %p151 = scmp.eq.s32.totalorder %s31, 0
      %p152 = por %p150, %p151
      %s153 = ssub.s32 %s33, %s40
      %s154 = ssub.s32 %s32, %s44
      %s155 = sor.u32 %s153, %s154
      %p156 = scmp.eq.s32.totalorder %s155, 0
      %s158 = sadd.s32 %s157, 1
      %s159 = scalar_select %p156, %s157, %s158
      %p162 = pneg %p156
      %p163 = scmp.eq.s32.totalorder %s25, 1
      %p164 = por %p162, %p163
      %p165 = scmp.ne.s32.totalorder %s157, %s160
      %p166 = scmp.eq.s32.totalorder %s25, 0
      %p167 = por %p165, %p166
      %p168 = scmp.ne.s32.totalorder %s157, %s160
      %p169 = scmp.eq.s32.totalorder %s30, 1
      %p170 = por %p168, %p169
      %p171 = scmp.ne.s32.totalorder %s160, %s161
      %p172 = scmp.eq.s32.totalorder %s30, 0
      %p173 = por %p171, %p172
      %p174 = scmp.ne.s32.totalorder %s160, %s161
      %p175 = scmp.eq.s32.totalorder %s31, 1
      %p176 = por %p174, %p175
      %p178 = scmp.ne.s32.totalorder %s161, %s177
      %p179 = scmp.eq.s32.totalorder %s31, 0
      %p180 = por %p178, %p179
      %s181 = ssub.s32 %s33, %s40
      %s182 = ssub.s32 %s32, %s44
      %s183 = sor.u32 %s181, %s182
      %p184 = scmp.eq.s32.totalorder %s183, 0
      %s186 = sadd.s32 %s185, 1
      %s187 = scalar_select %p184, %s185, %s186
      %p190 = pneg %p184
      %p191 = scmp.eq.s32.totalorder %s25, 1
      %p192 = por %p190, %p191
      %p193 = scmp.ne.s32.totalorder %s185, %s188
      %p194 = scmp.eq.s32.totalorder %s25, 0
      %p195 = por %p193, %p194
      %p196 = scmp.ne.s32.totalorder %s185, %s188
      %p197 = scmp.eq.s32.totalorder %s30, 1
      %p198 = por %p196, %p197
      %p199 = scmp.ne.s32.totalorder %s188, %s189
      %p200 = scmp.eq.s32.totalorder %s30, 0
      %p201 = por %p199, %p200
      %p202 = scmp.ne.s32.totalorder %s188, %s189
      %p203 = scmp.eq.s32.totalorder %s31, 1
      %p204 = por %p202, %p203
      %p206 = scmp.ne.s32.totalorder %s189, %s205
      %p207 = scmp.eq.s32.totalorder %s31, 0
      %p208 = por %p206, %p207
      %p209 = scmp.le.s32.totalorder 1, %s25
      %p210 = scmp.lt.s32.totalorder %s25, 3
      %p211 = pnand %p209, %p210
      %p212 = pneg %p211
      // Predicated region
      $region9: #{tpu_custom_call.1} parent=5 // pred_check
        _
      $region10: #{tpu_custom_call.1} parent=5 // pred_check_branch
        %214 = sbr.rel (%p211) target = $region12
      $region11: #{tpu_custom_call.1} parent=5 // pred_region
        %s215 = ssub.s32 %s25, 1
        // Predicated region
        $region13: #{tpu_custom_call.1} parent=11 // pred_check
          %p216 = pneg %p119
        $region14: #{tpu_custom_call.1} parent=11 // pred_check_branch
          %218 = sbr.rel (%p216) target = $region16
        $region15: #{tpu_custom_call.1} parent=11 // pred_region
          %220 = vsyncadd [#allocation6], 0
          %s221 = smul.addr %s34, 8
          %s222 = scalar_lea.hbm %s2, %s221
          %s224 = sshll.u32 %s222, 4
          %s225 = int_to_ptr.hbm [resolvable:$true] %s224
          %s226 = sshll.u32 [#allocation7], 4
          %s227 = int_to_ptr.vmem [resolvable:$true] %s226
          %229 = dma.hbm_to_vmem [thread:$0]  %s225, 128, %s227, [#allocation6]
        $region16: #{tpu_custom_call.1} parent=11 // pred_fallthru
          _
        // Predicated region
        $region17: #{tpu_custom_call.1} parent=11 // pred_check
          %p230 = pneg %p145
        $region18: #{tpu_custom_call.1} parent=11 // pred_check_branch
          %232 = sbr.rel (%p230) target = $region20
        $region19: #{tpu_custom_call.1} parent=11 // pred_region
          %234 = vsyncadd [#allocation9], 0
          %s235 = smul.addr %s34, 8
          %s236 = scalar_lea.hbm %s3, %s235
          %s238 = sshll.u32 %s236, 4
          %s239 = int_to_ptr.hbm [resolvable:$true] %s238
          %s240 = sshll.u32 [#allocation8], 4
          %s241 = int_to_ptr.vmem [resolvable:$true] %s240
          %243 = dma.hbm_to_vmem [thread:$0]  %s239, 128, %s241, [#allocation9]
        $region20: #{tpu_custom_call.1} parent=11 // pred_fallthru
          _
      $region12: #{tpu_custom_call.1} parent=5 // pred_fallthru
        _
      %p244 = scmp.lt.s32.totalorder %s25, 2
      // Predicated region
      $region21: #{tpu_custom_call.1} parent=5 // pred_check
        %p245 = pneg %p244
      $region22: #{tpu_custom_call.1} parent=5 // pred_check_branch
        %247 = sbr.rel (%p245) target = $region24
      $region23: #{tpu_custom_call.1} parent=5 // pred_region
        // Predicated region
        $region25: #{tpu_custom_call.1} parent=23 // pred_check
          %p248 = pneg %p59
        $region26: #{tpu_custom_call.1} parent=23 // pred_check_branch
          %250 = sbr.rel (%p248) target = $region28
        $region27: #{tpu_custom_call.1} parent=23 // pred_region
          %s251 = sand.u32 %s49, 1
          %s252 = scalar_lea.sflag [#allocation3], %s251
          %s253 = sand.u32 %s49, 1
          %s254 = smul.addr %s253, 8
          %s255 = scalar_lea.vmem [#allocation2], %s254
          %257 = vsyncadd %s252, 0
          %s258 = sadd.s32 %s32, %s33
          %s259 = smul.addr %s258, 8
          %s260 = scalar_lea.hbm %s0, %s259
          %s262 = sshll.u32 %s260, 4
          %s263 = int_to_ptr.hbm [resolvable:$true] %s262
          %s264 = sshll.u32 %s255, 4
          %s265 = int_to_ptr.vmem [resolvable:$true] %s264
          %267 = dma.hbm_to_vmem [thread:$0]  %s263, 128, %s265, %s252
        $region28: #{tpu_custom_call.1} parent=23 // pred_fallthru
          _
        // Predicated region
        $region29: #{tpu_custom_call.1} parent=23 // pred_check
          %p268 = pneg %p87
        $region30: #{tpu_custom_call.1} parent=23 // pred_check_branch
          %270 = sbr.rel (%p268) target = $region32
        $region31: #{tpu_custom_call.1} parent=23 // pred_region
          %s271 = sand.u32 %s25, 1
          %s272 = scalar_lea.sflag [#allocation6], %s271
          %s273 = sand.u32 %s77, 1
          %s274 = smul.addr %s273, 8
          %s275 = scalar_lea.vmem [#allocation5], %s274
          %277 = vsyncadd %s272, 0
          %s278 = sadd.s32 %s32, %s33
          %s279 = smul.addr %s278, 8
          %s280 = scalar_lea.hbm %s1, %s279
          %s282 = sshll.u32 %s280, 4
          %s283 = int_to_ptr.hbm [resolvable:$true] %s282
          %s284 = sshll.u32 %s275, 4
          %s285 = int_to_ptr.vmem [resolvable:$true] %s284
          %287 = dma.hbm_to_vmem [thread:$0]  %s283, 128, %s285, %s272
        $region32: #{tpu_custom_call.1} parent=23 // pred_fallthru
          _
      $region24: #{tpu_custom_call.1} parent=5 // pred_fallthru
        _
      %p288 = scmp.le.s32.totalorder 1, %s25
      %p289 = scmp.lt.s32.totalorder %s25, 3
      %p290 = pnand %p288, %p289
      %p291 = pneg %p290
      // Predicated region
      $region33: #{tpu_custom_call.1} parent=5 // pred_check
        _
      $region34: #{tpu_custom_call.1} parent=5 // pred_check_branch
        %293 = sbr.rel (%p290) target = $region36
      $region35: #{tpu_custom_call.1} parent=5 // pred_region
        %s294 = ssub.s32 %s25, 1
        %s295 = sand.u32 %s52, 1
        %s296 = scalar_lea.sflag [#allocation3], %s295
        %s297 = sand.u32 %s52, 1
        %s298 = smul.addr %s297, 8
        %s299 = scalar_lea.vmem [#allocation2], %s298
        // Predicated region
        $region37: #{tpu_custom_call.1} parent=35 // pred_check
          %p300 = pneg %p65
        $region38: #{tpu_custom_call.1} parent=35 // pred_check_branch
          %302 = sbr.rel (%p300) target = $region40
        $region39: #{tpu_custom_call.1} parent=35 // pred_region
          %304 = dma.done %s296, 128
        $region40: #{tpu_custom_call.1} parent=35 // pred_fallthru
          _
        %s305 = sand.u32 %s30, 1
        %s306 = scalar_lea.sflag [#allocation6], %s305
        %s307 = sand.u32 %s80, 1
        %s308 = smul.addr %s307, 8
        %s309 = scalar_lea.vmem [#allocation5], %s308
        // Predicated region
        $region41: #{tpu_custom_call.1} parent=35 // pred_check
          %p310 = pneg %p93
        $region42: #{tpu_custom_call.1} parent=35 // pred_check_branch
          %312 = sbr.rel (%p310) target = $region44
        $region43: #{tpu_custom_call.1} parent=35 // pred_region
          %314 = dma.done %s306, 128
        $region44: #{tpu_custom_call.1} parent=35 // pred_fallthru
          _
        // Predicated region
        $region45: #{tpu_custom_call.1} parent=35 // pred_check
          %p315 = pneg %p119
        $region46: #{tpu_custom_call.1} parent=35 // pred_check_branch
          %317 = sbr.rel (%p315) target = $region48
        $region47: #{tpu_custom_call.1} parent=35 // pred_region
          %319 = dma.done [#allocation6], 128
        $region48: #{tpu_custom_call.1} parent=35 // pred_fallthru
          _
        // Predicated region
        $region49: #{tpu_custom_call.1} parent=35 // pred_check
          %p320 = pneg %p145
        $region50: #{tpu_custom_call.1} parent=35 // pred_check_branch
          %322 = sbr.rel (%p320) target = $region52
        $region51: #{tpu_custom_call.1} parent=35 // pred_region
          %324 = dma.done [#allocation9], 128
        $region52: #{tpu_custom_call.1} parent=35 // pred_fallthru
          _
        %s325 = sand.u32 %s52, 1
        %s326 = scalar_lea.sflag [#allocation3], %s325
        %s327 = sand.u32 %s52, 1
        %s328 = smul.addr %s327, 8
        %s329 = scalar_lea.vmem [#allocation2], %s328
        %p330 = pneg %p65
        %p331 = pneg %p62
        %s332 = sand.u32 %s30, 1
        %s333 = scalar_lea.sflag [#allocation6], %s332
        %s334 = sand.u32 %s80, 1
        %s335 = smul.addr %s334, 8
        %s336 = scalar_lea.vmem [#allocation5], %s335
        %p337 = pneg %p93
        %p338 = pneg %p90
        %p339 = pneg %p119
        %p340 = pneg %p116
        %p341 = pneg %p145
        %p342 = pneg %p142
        %p343 = pneg %p173
        %p344 = pneg %p170
        %s345 = sand.u32 %s160, 1
        %s346 = scalar_lea.sflag [#allocation4], %s345
        %s347 = sand.u32 %s160, 1
        %s348 = smul.addr %s347, 8
        %s349 = scalar_lea.vmem [#allocation10], %s348
        %p350 = pneg %p201
        %p351 = pneg %p198
        %s352 = sand.u32 %s188, 1
        %s353 = scalar_lea.sflag [#allocation12], %s352
        %s354 = sand.u32 %s188, 1
        %s355 = smul.addr %s354, 8
        %s356 = scalar_lea.vmem [#allocation11], %s355
        %v357 = vld [vmem:[#allocation7] sm:$0xff]
        %v358 = vld [vmem:[#allocation8] sm:$0xff]
        %v359 = vlaneseq
        %v360 = vand.u32 %v359, 127
        %vm361 = vcmp.lt.s32.totalorder %v360, 0
        %v362 = vsub.s32 0, %v360
        %v363 = vsel %vm361, %v362, %v360
        %v364 = vshrl.u32 %v363, 5
        %v365 = vand.u32 %v363, 31
        %v366 = vsub.s32 0, %v365
        %v367 = vsel %vm361, %v366, %v365
        %vm368 = vcmp.ne.s32.totalorder %v367, 0
        %vm369 = vcmp.lt.s32.totalorder %v367, 0
        %vm370 = vmand %vm369, %vm368
        %v371 = vadd.s32 %v367, 32
        %v372 = vsel %vm370, %v371, %v367
        %vm373 = vcmp.lt.s32.totalorder %v372, 16
        %v374 = vld [vmem:[%s299] sm:$0xff]
        %375 = vrot.lane.b32.xlu0 %v374, 112
        %v376 = vpop.permute.xlu0 %375
        %377 = vrot.lane.b32.xlu0 %v374, 16
        %v378 = vpop.permute.xlu0 %377
        %v379 = vsel %vm373, 1, 0
        %vm380 = vcmp.eq.s32.totalorder %v379, 1
        %v381 = vsel %vm380, %v376, %v378
        %v382 = vmul.f32 %v374, %v357
        %v383 = vmul.f32 %v381, %v358
        %v384 = vadd.f32 %v382, %v383
        %385 = vst [vmem:[%s349] sm:$0xff] %v384
        %v386 = vld [vmem:[%s309] sm:$0xff]
        %387 = vrot.lane.b32.xlu0 %v386, 112
        %v388 = vpop.permute.xlu0 %387
        %389 = vrot.lane.b32.xlu0 %v386, 16
        %v390 = vpop.permute.xlu0 %389
        %v391 = vsel %vm380, %v388, %v390
        %v392 = vmul.f32 %v386, %v357
        %v393 = vmul.f32 %v391, %v358
        %v394 = vadd.f32 %v392, %v393
        %395 = vst [vmem:[%s356] sm:$0xff] %v394
        %s396 = sand.u32 %s160, 1
        %s397 = scalar_lea.sflag [#allocation4], %s396
        %s398 = sand.u32 %s160, 1
        %s399 = smul.addr %s398, 8
        %s400 = scalar_lea.vmem [#allocation10], %s399
        %s401 = sand.u32 %s188, 1
        %s402 = scalar_lea.sflag [#allocation12], %s401
        %s403 = sand.u32 %s188, 1
        %s404 = smul.addr %s403, 8
        %s405 = scalar_lea.vmem [#allocation11], %s404
        // Predicated region
        $region53: #{tpu_custom_call.1} parent=35 // pred_check
          %p406 = pneg %p170
        $region54: #{tpu_custom_call.1} parent=35 // pred_check_branch
          %408 = sbr.rel (%p406) target = $region56
        $region55: #{tpu_custom_call.1} parent=35 // pred_region
          %410 = vsyncadd %s397, 0
          %s411 = sadd.s32 %s34, %s35
          %s412 = smul.addr %s411, 8
          %s413 = scalar_lea.hbm %s4, %s412
          %s415 = sshll.u32 %s400, 4
          %s416 = int_to_ptr.vmem [resolvable:$true] %s415
          %s417 = sshll.u32 %s413, 4
          %s418 = int_to_ptr.hbm [resolvable:$true] %s417
          %420 = dma.vmem_to_hbm [thread:$0]  %s416, 128, %s418, %s397
        $region56: #{tpu_custom_call.1} parent=35 // pred_fallthru
          _
        // Predicated region
        $region57: #{tpu_custom_call.1} parent=35 // pred_check
          %p421 = pneg %p198
        $region58: #{tpu_custom_call.1} parent=35 // pred_check_branch
          %423 = sbr.rel (%p421) target = $region60
        $region59: #{tpu_custom_call.1} parent=35 // pred_region
          %425 = vsyncadd %s402, 0
          %s426 = sadd.s32 %s34, %s35
          %s427 = smul.addr %s426, 8
          %s428 = scalar_lea.hbm %s5, %s427
          %s430 = sshll.u32 %s405, 4
          %s431 = int_to_ptr.vmem [resolvable:$true] %s430
          %s432 = sshll.u32 %s428, 4
          %s433 = int_to_ptr.hbm [resolvable:$true] %s432
          %435 = dma.vmem_to_hbm [thread:$0]  %s431, 128, %s433, %s402
        $region60: #{tpu_custom_call.1} parent=35 // pred_fallthru
          _
      $region36: #{tpu_custom_call.1} parent=5 // pred_fallthru
        _
      %p436 = scmp.le.s32.totalorder 2, %s25
      // Predicated region
      $region61: #{tpu_custom_call.1} parent=5 // pred_check
        %p437 = pneg %p436
      $region62: #{tpu_custom_call.1} parent=5 // pred_check_branch
        %439 = sbr.rel (%p437) target = $region64
      $region63: #{tpu_custom_call.1} parent=5 // pred_region
        %s440 = ssub.s32 %s25, 2
        // Predicated region
        $region65: #{tpu_custom_call.1} parent=63 // pred_check
          %p441 = pneg %p176
        $region66: #{tpu_custom_call.1} parent=63 // pred_check_branch
          %443 = sbr.rel (%p441) target = $region68
        $region67: #{tpu_custom_call.1} parent=63 // pred_region
          %s444 = sand.u32 %s161, 1
          %s445 = scalar_lea.sflag [#allocation4], %s444
          %s446 = sand.u32 %s161, 1
          %s447 = smul.addr %s446, 8
          %s448 = scalar_lea.vmem [#allocation10], %s447
          %450 = dma.done %s445, 128
        $region68: #{tpu_custom_call.1} parent=63 // pred_fallthru
          _
        // Predicated region
        $region69: #{tpu_custom_call.1} parent=63 // pred_check
          %p451 = pneg %p204
        $region70: #{tpu_custom_call.1} parent=63 // pred_check_branch
          %453 = sbr.rel (%p451) target = $region72
        $region71: #{tpu_custom_call.1} parent=63 // pred_region
          %s454 = sand.u32 %s189, 1
          %s455 = scalar_lea.sflag [#allocation12], %s454
          %s456 = sand.u32 %s189, 1
          %s457 = smul.addr %s456, 8
          %s458 = scalar_lea.vmem [#allocation11], %s457
          %460 = dma.done %s455, 128
        $region72: #{tpu_custom_call.1} parent=63 // pred_fallthru
          _
      $region64: #{tpu_custom_call.1} parent=5 // pred_fallthru
        _
    $region6: #{tpu_custom_call.1} parent=1 // loop_footer
      %s29 = sadd.s32 1, %s25
    $region7: #{tpu_custom_call.1} parent=1 // loop_footer_branch
      %24 = sbr.rel target = $region3
    $region8: #{tpu_custom_call.1} parent=1 // loop_exit
      _
    %461 = vsyncpa [#allocation3], 1
    %s462 = scalar_lea.sflag [#allocation3], 1
    %463 = vsyncpa %s462, 1
    %464 = vsyncpa [#allocation6], 1
    %s465 = scalar_lea.sflag [#allocation6], 1
    %466 = vsyncpa %s465, 1
    %467 = vsyncpa [#allocation9], 1
    %468 = vsyncpa [#allocation4], 1
    %s469 = scalar_lea.sflag [#allocation4], 1
    %470 = vsyncpa %s469, 1
    %471 = vsyncpa [#allocation12], 1
    %s472 = scalar_lea.sflag [#allocation12], 1
    %473 = vsyncpa %s472, 1

</llo_original>
